<compile_context>
chip_gen: v7x
topology: tpu7x:2x2x1
jax: 0.10.0
libtpu: 0.0.40
codegen_flags: <defaults>
</compile_context>

<pallas_src>
import functools

import jax
import jax.numpy as jnp
from jax.experimental import pallas as pl
from jax.experimental.pallas import tpu as pltpu


# ---------------------------------------------------------------------------
# Kernel bodies
# ---------------------------------------------------------------------------
def _conv1x1_kernel(x_ref, w_ref, b_ref, o_ref):
    # x_ref: (1, C_in, tm); w_ref: (C_out, C_in); b_ref: (C_out, 1) f32.
    acc = jnp.dot(w_ref[...], x_ref[0], preferred_element_type=jnp.float32)
    o_ref[0] = (acc + b_ref[...]).astype(o_ref.dtype)


def _conv1x1_res_kernel(x_ref, w_ref, b_ref, r_ref, o_ref):
    # Same as above plus fused residual add (r_ref: (1, C_out, tm)).
    acc = jnp.dot(w_ref[...], x_ref[0], preferred_element_type=jnp.float32)
    o_ref[0] = (acc + b_ref[...] + r_ref[0].astype(jnp.float32)).astype(o_ref.dtype)


def _conv1x1_kernel_kt(x_ref, w_ref, b_ref, o_ref, acc_ref):
    # K-tiled: innermost grid axis runs over C_in chunks; f32 VMEM accumulator.
    k = pl.program_id(2)

    @pl.when(k == 0)
    def _():
        acc_ref[...] = jnp.zeros_like(acc_ref)

    acc_ref[...] += jnp.dot(w_ref[...], x_ref[0], preferred_element_type=jnp.float32)

    @pl.when(k == pl.num_programs(2) - 1)
    def _():
        o_ref[0] = (acc_ref[...] + b_ref[...]).astype(o_ref.dtype)


def _conv1x1_res_kernel_kt(x_ref, w_ref, b_ref, r_ref, o_ref, acc_ref):
    k = pl.program_id(2)

    @pl.when(k == 0)
    def _():
        acc_ref[...] = jnp.zeros_like(acc_ref)

    acc_ref[...] += jnp.dot(w_ref[...], x_ref[0], preferred_element_type=jnp.float32)

    @pl.when(k == pl.num_programs(2) - 1)
    def _():
        o_ref[0] = (acc_ref[...] + b_ref[...]
                    + r_ref[0].astype(jnp.float32)).astype(o_ref.dtype)


# ---------------------------------------------------------------------------
# Tiling heuristics
# ---------------------------------------------------------------------------
def _vmem_budget_and_limit():
    """Generation-aware VMEM budgeting (v7x: 64 MiB/TC; v5e/v6e: 128 MiB)."""
    try:
        cap = int(pltpu.get_tpu_info().vmem_capacity_bytes)
    except Exception:
        cap = None
    if cap is None or cap <= (64 << 20) + (1 << 20):   # v7x or unknown -> conservative
        return 24 << 20, 48 << 20
    return 44 << 20, 80 << 20                           # v5e / v6e


def _pick_tiles(M, N, C_in, C_out, itemsize, *, rl, max_tm, vmem_budget,
                min_blocks=8, ktile_threshold=1024, force_k_tile=None):
    """Choose (tm, tk).  tk == C_in means no K-tiling over the channel axis."""
    n_out_streams = 2 if rl else 1          # output (+ residual) columns per lane

    def tm_for(tk, with_acc):
        # Double-buffered x / out / residual blocks per lane column (+ f32 acc).
        per_lane = 2 * (tk + n_out_streams * C_out) * itemsize
        if with_acc:
            per_lane += 4 * C_out
        # Resident weight (double-buffered) + bias are fixed overhead.
        fixed = 2 * C_out * tk * itemsize + 4 * C_out
        budget = max(vmem_budget - fixed, 1 << 20)
        cap = min(max_tm, max(128, budget // max(per_lane, 1)))
        # Keep enough grid blocks for megacore sharding + double-buffer overlap.
        blocks_per_n = -(-min_blocks // N)
        if blocks_per_n > 1:
            cap = min(cap, max(128, M // blocks_per_n))
        if cap >= M:
            return M                         # full dim: always a legal block shape
        cap = max(128, (cap // 128) * 128)
        for t in range(cap, 127, -128):      # prefer a divisor of M (no masked tail)
            if M % t == 0:
                return t
        return cap                           # non-divisor: Pallas masks the tail block

    if force_k_tile is not None:             # caller guarantees C_in % force_k_tile == 0
        return tm_for(force_k_tile, with_acc=True), force_k_tile

    tm_simple = tm_for(C_in, with_acc=False)
    if tm_simple >= ktile_threshold or tm_simple >= M:
        return tm_simple, C_in

    # Very large C_in squeezed the lane tile: tile C_in instead (keep lanes big).
    tk = None
    for cand in (1024, 512, 256, 128):       # lane-dim of the weight block: mult of 128
        if cand < C_in and C_in % cand == 0:
            tk = cand
            break
    if tk is None:
        return tm_simple, C_in
    tm_k = tm_for(tk, with_acc=True)
    if tm_k > tm_simple:
        return tm_k, tk
    return tm_simple, C_in


# ---------------------------------------------------------------------------
# Wrapper
# ---------------------------------------------------------------------------
def output_layer_pallas(x, inp, weight, bias, *, rl=False, max_tm=32768,
                        force_k_tile=None):
    """x: (N, C_in, D, H, W); inp: (N, C_out, D, H, W) residual (used iff rl);
    weight: (C_out, C_in, 1, 1, 1); bias: (C_out,).  Returns (N, C_out, D, H, W).
    For the rl=True path, donate `inp` at the jit call site so the residual
    buffer is reused in place (input_output_aliases)."""
    N, C_in, D, H, W = x.shape
    C_out = weight.shape[0]
    M = D * H * W

    # Channels-first, transpose-free views.
    x3 = x.reshape(N, C_in, M)
    w2 = weight.reshape(C_out, C_in)
    b2 = bias.astype(jnp.float32).reshape(C_out, 1)   # pre-cast once, held resident

    itemsize = jnp.dtype(x.dtype).itemsize
    vmem_budget, vmem_limit = _vmem_budget_and_limit()
    tm, tk = _pick_tiles(M, N, C_in, C_out, itemsize, rl=rl, max_tm=max_tm,
                         vmem_budget=vmem_budget, force_k_tile=force_k_tile)

    out_shape = jax.ShapeDtypeStruct((N, C_out, M), x.dtype)
    res_bytes = N * C_out * M * itemsize if rl else 0
    cost = pl.CostEstimate(
        flops=2 * N * M * C_in * C_out,
        transcendentals=0,
        bytes_accessed=(N * C_in * M + N * C_out * M) * itemsize
                       + res_bytes + C_out * C_in * itemsize + 4 * C_out,
    )

    k_tiled = tk != C_in
    if k_tiled:
        grid = (N, pl.cdiv(M, tm), C_in // tk)
        x_spec = pl.BlockSpec((1, tk, tm), lambda n, m, k: (n, k, m))
        w_spec = pl.BlockSpec((C_out, tk), lambda n, m, k: (0, k))
        b_spec = pl.BlockSpec((C_out, 1), lambda n, m, k: (0, 0))
        r_spec = pl.BlockSpec((1, C_out, tm), lambda n, m, k: (n, 0, m))
        o_spec = pl.BlockSpec((1, C_out, tm), lambda n, m, k: (n, 0, m))
        scratch = [pltpu.VMEM((C_out, tm), jnp.float32)]
        semantics = ("parallel", "parallel", "arbitrary")
        kern = _conv1x1_res_kernel_kt if rl else _conv1x1_kernel_kt
    else:
        grid = (N, pl.cdiv(M, tm))
        x_spec = pl.BlockSpec((1, C_in, tm), lambda n, m: (n, 0, m))
        w_spec = pl.BlockSpec((C_out, C_in), lambda n, m: (0, 0))   # resident
        b_spec = pl.BlockSpec((C_out, 1), lambda n, m: (0, 0))      # resident
        r_spec = pl.BlockSpec((1, C_out, tm), lambda n, m: (n, 0, m))
        o_spec = pl.BlockSpec((1, C_out, tm), lambda n, m: (n, 0, m))
        scratch = []
        semantics = ("parallel", "parallel")
        kern = _conv1x1_res_kernel if rl else _conv1x1_kernel

    cparams = pltpu.CompilerParams(
        dimension_semantics=semantics,
        vmem_limit_bytes=vmem_limit,
    )

    if rl:
        r3 = inp.reshape(N, C_out, M)
        aliases = {3: 0} if r3.dtype == x.dtype else {}
        out3 = pl.pallas_call(
            kern,
            out_shape=out_shape,
            grid_spec=pltpu.PrefetchScalarGridSpec(
                num_scalar_prefetch=0,
                grid=grid,
                in_specs=[x_spec, w_spec, b_spec, r_spec],
                out_specs=o_spec,
                scratch_shapes=scratch,
            ),
            compiler_params=cparams,
            cost_estimate=cost,
            input_output_aliases=aliases,
        )(x3, w2, b2, r3)
    else:
        out3 = pl.pallas_call(
            kern,
            out_shape=out_shape,
            grid_spec=pltpu.PrefetchScalarGridSpec(
                num_scalar_prefetch=0,
                grid=grid,
                in_specs=[x_spec, w_spec, b_spec],
                out_specs=o_spec,
                scratch_shapes=scratch,
            ),
            compiler_params=cparams,
            cost_estimate=cost,
        )(x3, w2, b2)

    return out3.reshape(N, C_out, D, H, W)


def _reference(x, inp, weight, bias, rl):
    # Plain-JAX reference for a 1x1x1 Conv3d in NCDHW.
    w2d = weight.reshape(weight.shape[0], weight.shape[1])      # (C_out, C_in)
    out = jnp.einsum("ncdhw,oc->nodhw", x, w2d) + bias[None, :, None, None, None]
    if rl:
        out = out + inp
    return out


if __name__ == "__main__":
    key = jax.random.PRNGKey(0)
    k_x, k_r, k_w, k_b, k_x2, k_r2, k_w2, k_b2 = jax.random.split(key, 8)

    # ---- Small shapes consistent with the module: (N, C_in, D, H, W) ----
    N, C_in, C_out, D, H, W = 2, 8, 4, 8, 8, 8
    x = jax.random.normal(k_x, (N, C_in, D, H, W), dtype=jnp.float32)
    residual = jax.random.normal(k_r, (N, C_out, D, H, W), dtype=jnp.float32)
    weight = jax.random.normal(k_w, (C_out, C_in, 1, 1, 1), dtype=jnp.float32) * 0.1
    bias = jax.random.normal(k_b, (C_out,), dtype=jnp.float32) * 0.1

    # rl=False path (plain 1x1x1 conv).
    fn_plain = jax.jit(functools.partial(output_layer_pallas, rl=False))
    out_plain = fn_plain(x, residual, weight, bias)
    jax.block_until_ready(out_plain)
    ref_plain = _reference(x, residual, weight, bias, rl=False)
    assert out_plain.shape == (N, C_out, D, H, W)
    assert jnp.allclose(out_plain, ref_plain, atol=1e-5, rtol=1e-5)

    # rl=True path: donate the residual so input_output_aliases reuses its buffer.
    ref_res = _reference(x, residual, weight, bias, rl=True)     # before donation
    fn_res = jax.jit(functools.partial(output_layer_pallas, rl=True),
                     donate_argnums=(1,))
    out_res = fn_res(x, residual, weight, bias)
    jax.block_until_ready(out_res)
    assert out_res.shape == (N, C_out, D, H, W)
    assert jnp.allclose(out_res, ref_res, atol=1e-5, rtol=1e-5)

    # K-tiled path (exercised explicitly at a modest C_in via force_k_tile).
    N2, C_in2, C_out2 = 2, 256, 8
    x2 = jax.random.normal(k_x2, (N2, C_in2, D, H, W), dtype=jnp.float32)
    res2 = jax.random.normal(k_r2, (N2, C_out2, D, H, W), dtype=jnp.float32)
    weight2 = jax.random.normal(k_w2, (C_out2, C_in2, 1, 1, 1), dtype=jnp.float32) * 0.05
    bias2 = jax.random.normal(k_b2, (C_out2,), dtype=jnp.float32) * 0.1
    fn_kt = jax.jit(functools.partial(output_layer_pallas, rl=True, force_k_tile=128))
    out_kt = fn_kt(x2, res2, weight2, bias2)
    jax.block_until_ready(out_kt)
    ref_kt = _reference(x2, res2, weight2, bias2, rl=True)
    assert out_kt.shape == (N2, C_out2, D, H, W)
    assert jnp.allclose(out_kt, ref_kt, atol=1e-3, rtol=1e-3)

    print("KERNEL_OK")
</pallas_src>

<mosaic_0001>
module attributes {stable_mosaic.version = 11 : i64} {
  func.func @_conv1x1_kernel(%arg0: i32, %arg1: i32, %arg2: memref<1x8x128xf32, #tpu.memory_space<vmem>>, %arg3: memref<4x8xf32, #tpu.memory_space<vmem>>, %arg4: memref<4x1xf32, #tpu.memory_space<vmem>>, %arg5: memref<1x4x128xf32, #tpu.memory_space<vmem>>) attributes {dimension_semantics = [#tpu.dimension_semantics<parallel>, #tpu.dimension_semantics<parallel>], iteration_bounds = array<i64: 2, 4>, scalar_prefetch = 0 : i64, scratch_operands = 0 : i64, tpu.core_type = #tpu.core_type<tc>, window_params = [{transform_indices = @transform_0, window_bounds = array<i64: 1, 8, 128>}, {pipeline_mode = #tpu.pipeline_mode<synchronous>, transform_indices = @transform_1, window_bounds = array<i64: 4, 8>}, {pipeline_mode = #tpu.pipeline_mode<synchronous>, transform_indices = @transform_2, window_bounds = array<i64: 4, 1>}, {transform_indices = @transform_3, window_bounds = array<i64: 1, 4, 128>}]} {
    %c0 = arith.constant 0 : index
    %c0_0 = arith.constant 0 : index
    %0 = vector.load %arg3[%c0, %c0_0] : memref<4x8xf32, #tpu.memory_space<vmem>>, vector<4x8xf32>
    %c0_1 = arith.constant 0 : index
    %c0_2 = arith.constant 0 : index
    %c0_3 = arith.constant 0 : index
    %1 = vector.load %arg2[%c0_1, %c0_2, %c0_3] : memref<1x8x128xf32, #tpu.memory_space<vmem>>, vector<1x8x128xf32>
    %2 = vector.shape_cast %1 : vector<1x8x128xf32> to vector<8x128xf32>
    %cst = arith.constant dense<0.000000e+00> : vector<4x128xf32>
    %3 = tpu.matmul %0, %2, %cst {dimension_numbers = #tpu.dot_dimension_numbers<[1], [0], [0], [1], [0, 0, 1, 1], [], []>} : vector<4x8xf32>, vector<8x128xf32>, vector<4x128xf32> -> vector<4x128xf32>
    %c0_4 = arith.constant 0 : index
    %c0_5 = arith.constant 0 : index
    %4 = vector.load %arg4[%c0_4, %c0_5] : memref<4x1xf32, #tpu.memory_space<vmem>>, vector<4x1xf32>
    %5 = vector.broadcast %4 : vector<4x1xf32> to vector<4x128xf32>
    %6 = arith.addf %3, %5 : vector<4x128xf32>
    %c0_6 = arith.constant 0 : index
    %c0_7 = arith.constant 0 : index
    %c0_8 = arith.constant 0 : index
    %7 = vector.load %arg5[%c0_6, %c0_7, %c0_8] : memref<1x4x128xf32, #tpu.memory_space<vmem>>, vector<1x4x128xf32>
    %8 = vector.shape_cast %7 : vector<1x4x128xf32> to vector<4x128xf32>
    %9 = vector.shape_cast %6 : vector<4x128xf32> to vector<1x4x128xf32>
    tpu.vector_store %arg5[%c0_6, %c0_7, %c0_8], %9 {strides = array<i32>} : memref<1x4x128xf32, #tpu.memory_space<vmem>>, vector<1x4x128xf32>,
    return
  }
  func.func @transform_0(%arg0: i32, %arg1: i32) -> (i32, i32, i32) {
    %c0_i32 = arith.constant 0 : i32
    %c0_i32_0 = arith.constant 0 : i32
    return %arg0, %c0_i32, %arg1 : i32, i32, i32
  }
  func.func @transform_1(%arg0: i32, %arg1: i32) -> (i32, i32) {
    %c0_i32 = arith.constant 0 : i32
    %c0_i32_0 = arith.constant 0 : i32
    %c0_i32_1 = arith.constant 0 : i32
    return %c0_i32, %c0_i32_0 : i32, i32
  }
  func.func @transform_2(%arg0: i32, %arg1: i32) -> (i32, i32) {
    %c0_i32 = arith.constant 0 : i32
    %c0_i32_0 = arith.constant 0 : i32
    %c0_i32_1 = arith.constant 0 : i32
    return %c0_i32, %c0_i32_0 : i32, i32
  }
  func.func @transform_3(%arg0: i32, %arg1: i32) -> (i32, i32, i32) {
    %c0_i32 = arith.constant 0 : i32
    %c0_i32_0 = arith.constant 0 : i32
    return %arg0, %c0_i32, %arg1 : i32, i32, i32
  }
}

</mosaic_0001>

<llo_original>
// kernel: output_layer_pallas.1
$region0: #{output_layer_pallas.1}
  #allocation0 [shape = 'u32[]', space=smem, size = 0x4, offset = 0x4, fixed_abs, tag = 'smem constant byte address 0x4 - core index']
  #allocation1 [shape = 'u32[144,128]{1,0:T(1,128)}', space=vmem, size = 0x12000, scoped, tag = 'internal scratch']
  %s0 = inlined_call_operand.vmem [shape: f32[2,8,512], index: 0, kind: input, shape index: {}]
  %s1 = inlined_call_operand.vmem [shape: f32[4,8], index: 1, kind: input, shape index: {}]
  %s2 = inlined_call_operand.vmem [shape: f32[4,1], index: 2, kind: input, shape index: {}]
  %s3 = inlined_call_operand.vmem [shape: f32[2,4,512], index: 3, kind: output, shape index: {}]
  %s4 = sld [smem:[#allocation0]]
  $region45: #{output_layer_pallas.1} parent=0
    _
  %s6 = ssub.s32 1, %s4
  %s7 = scalar_select 0, %s6, %s4
  loop: start=0, step=1, limit=10
  $region2: #{output_layer_pallas.1} parent=0 // loop_pre_header
    _
  $region3: #{output_layer_pallas.1} parent=0 // loop_header
    %s9 = sphi 0, %s13
    %p10 = scmp.ge.s32.totalorder %s9, 10
    %s16 = sphi 0, %s28
    %s17 = sphi 0, %s24
    %s18 = sphi 0, %s16
    %s19 = sphi 0, %s17
    %s20 = sphi 0, %s18
    %s21 = sphi 0, %s19
    %s33 = sphi 0, %s35
    %s36 = sphi 0, %s33
    %s37 = sphi 0, %s36
    %s53 = sphi 0, %s37
    %s57 = sphi 0, %s57
    %s59 = sphi 0, %s57
    %s60 = sphi 0, %s59
    %s74 = sphi 0, %s60
    %s78 = sphi 0, %s78
    %s80 = sphi 0, %s78
    %s81 = sphi 0, %s80
    %s95 = sphi 0, %s81
    %s103 = sphi 0, %s105
    %s106 = sphi 0, %s103
    %s107 = sphi 0, %s106
    %s123 = sphi 0, %s107
  $region4: #{output_layer_pallas.1} parent=0 // loop_header_branch
    %12 = sbr.rel (%p10) target = $region8
  $region5: #{output_layer_pallas.1} parent=0 // loop_body
    %s14 = ssub.s32 %s9, 1
    %s15 = ssub.s32 %s9, 2
    %s22 = sadd.s32 1, %s17
    %p23 = scmp.ge.s32.totalorder %s22, 4
    %s24 = scalar_select %p23, 0, %s22
    %s25 = sadd.s32 1, %s16
    %s26 = scalar_select %p23, %s25, %s16
    %p27 = scmp.ge.s32.totalorder %s26, 2
    %s28 = scalar_select %p27, 0, %s26
    %s29 = ssub.s32 %s16, %s28
    %s30 = ssub.s32 %s17, %s24
    %s31 = sor.u32 %s29, %s30
    %p32 = scmp.eq.s32.totalorder %s31, 0
    %s34 = sadd.s32 %s33, 1
    %s35 = scalar_select %p32, %s33, %s34
    %p38 = pneg %p32
    %p39 = scmp.eq.s32.totalorder %s9, 7
    %p40 = por %p38, %p39
    %p41 = scmp.ne.s32.totalorder %s33, %s36
    %p42 = scmp.eq.s32.totalorder %s9, 0
    %p43 = por %p41, %p42
    %p44 = scmp.ne.s32.totalorder %s33, %s36
    %p45 = scmp.eq.s32.totalorder %s14, 7
    %p46 = por %p44, %p45
    %p47 = scmp.ne.s32.totalorder %s36, %s37
    %p48 = scmp.eq.s32.totalorder %s14, 0
    %p49 = por %p47, %p48
    %p50 = scmp.ne.s32.totalorder %s36, %s37
    %p51 = scmp.eq.s32.totalorder %s15, 7
    %p52 = por %p50, %p51
    %p54 = scmp.ne.s32.totalorder %s37, %s53
    %p55 = scmp.eq.s32.totalorder %s15, 0
    %p56 = por %p54, %p55
    %s58 = sadd.s32 %s57, 1
    %p61 = scmp.eq.s32.totalorder %s9, 7
    %p62 = scmp.ne.s32.totalorder %s57, %s59
    %p63 = scmp.eq.s32.totalorder %s9, 0
    %p64 = por %p62, %p63
    %p65 = scmp.ne.s32.totalorder %s57, %s59
    %p66 = scmp.eq.s32.totalorder %s14, 7
    %p67 = por %p65, %p66
    %p68 = scmp.ne.s32.totalorder %s59, %s60
    %p69 = scmp.eq.s32.totalorder %s14, 0
    %p70 = por %p68, %p69
    %p71 = scmp.ne.s32.totalorder %s59, %s60
    %p72 = scmp.eq.s32.totalorder %s15, 7
    %p73 = por %p71, %p72
    %p75 = scmp.ne.s32.totalorder %s60, %s74
    %p76 = scmp.eq.s32.totalorder %s15, 0
    %p77 = por %p75, %p76
    %s79 = sadd.s32 %s78, 1
    %p82 = scmp.eq.s32.totalorder %s9, 7
    %p83 = scmp.ne.s32.totalorder %s78, %s80
    %p84 = scmp.eq.s32.totalorder %s9, 0
    %p85 = por %p83, %p84
    %p86 = scmp.ne.s32.totalorder %s78, %s80
    %p87 = scmp.eq.s32.totalorder %s14, 7
    %p88 = por %p86, %p87
    %p89 = scmp.ne.s32.totalorder %s80, %s81
    %p90 = scmp.eq.s32.totalorder %s14, 0
    %p91 = por %p89, %p90
    %p92 = scmp.ne.s32.totalorder %s80, %s81
    %p93 = scmp.eq.s32.totalorder %s15, 7
    %p94 = por %p92, %p93
    %p96 = scmp.ne.s32.totalorder %s81, %s95
    %p97 = scmp.eq.s32.totalorder %s15, 0
    %p98 = por %p96, %p97
    %s99 = ssub.s32 %s16, %s28
    %s100 = ssub.s32 %s17, %s24
    %s101 = sor.u32 %s99, %s100
    %p102 = scmp.eq.s32.totalorder %s101, 0
    %s104 = sadd.s32 %s103, 1
    %s105 = scalar_select %p102, %s103, %s104
    %p108 = pneg %p102
    %p109 = scmp.eq.s32.totalorder %s9, 7
    %p110 = por %p108, %p109
    %p111 = scmp.ne.s32.totalorder %s103, %s106
    %p112 = scmp.eq.s32.totalorder %s9, 0
    %p113 = por %p111, %p112
    %p114 = scmp.ne.s32.totalorder %s103, %s106
    %p115 = scmp.eq.s32.totalorder %s14, 7
    %p116 = por %p114, %p115
    %p117 = scmp.ne.s32.totalorder %s106, %s107
    %p118 = scmp.eq.s32.totalorder %s14, 0
    %p119 = por %p117, %p118
    %p120 = scmp.ne.s32.totalorder %s106, %s107
    %p121 = scmp.eq.s32.totalorder %s15, 7
    %p122 = por %p120, %p121
    %p124 = scmp.ne.s32.totalorder %s107, %s123
    %p125 = scmp.eq.s32.totalorder %s15, 0
    %p126 = por %p124, %p125
    %p127 = scmp.le.s32.totalorder 1, %s9
    %p128 = scmp.lt.s32.totalorder %s9, 9
    %p129 = pnand %p127, %p128
    %p130 = pneg %p129
    // Predicated region
    $region9: #{output_layer_pallas.1} parent=5 // pred_check
      _
    $region10: #{output_layer_pallas.1} parent=5 // pred_check_branch
      %132 = sbr.rel (%p129) target = $region12
    $region11: #{output_layer_pallas.1} parent=5 // pred_region
      %s133 = ssub.s32 %s9, 1
      // Predicated region
      $region13: #{output_layer_pallas.1} parent=11 // pred_check
        %p134 = pneg %p70
      $region14: #{output_layer_pallas.1} parent=11 // pred_check_branch
        %136 = sbr.rel (%p134) target = $region16
      $region15: #{output_layer_pallas.1} parent=11 // pred_region
        _
      $region16: #{output_layer_pallas.1} parent=11 // pred_fallthru
        _
      // Predicated region
      $region17: #{output_layer_pallas.1} parent=11 // pred_check
        %p137 = pneg %p91
      $region18: #{output_layer_pallas.1} parent=11 // pred_check_branch
        %139 = sbr.rel (%p137) target = $region20
      $region19: #{output_layer_pallas.1} parent=11 // pred_region
        _
      $region20: #{output_layer_pallas.1} parent=11 // pred_fallthru
        _
    $region12: #{output_layer_pallas.1} parent=5 // pred_fallthru
      _
    %p140 = scmp.lt.s32.totalorder %s9, 8
    // Predicated region
    $region21: #{output_layer_pallas.1} parent=5 // pred_check
      %p141 = pneg %p140
    $region22: #{output_layer_pallas.1} parent=5 // pred_check_branch
      %143 = sbr.rel (%p141) target = $region24
    $region23: #{output_layer_pallas.1} parent=5 // pred_region
      // Predicated region
      $region25: #{output_layer_pallas.1} parent=23 // pred_check
        %p144 = pneg %p43
      $region26: #{output_layer_pallas.1} parent=23 // pred_check_branch
        %146 = sbr.rel (%p144) target = $region28
      $region27: #{output_layer_pallas.1} parent=23 // pred_region
        %p147 = scmp.lt.s32.totalorder %s16, 1
        %s148 = scalar_select %p147, %s16, 1
        %p149 = scmp.lt.s32.totalorder %s17, 3
        %s150 = scalar_select %p149, %s17, 3
        %s151 = smul.addr %s148, 4
        %s152 = sadd.s32 %s150, %s151
        %s153 = smul.addr %s152, 8
        %s154 = scalar_lea.vmem %s0, %s153
      $region28: #{output_layer_pallas.1} parent=23 // pred_fallthru
        _
    $region24: #{output_layer_pallas.1} parent=5 // pred_fallthru
      _
    %p155 = scmp.le.s32.totalorder 1, %s9
    %p156 = scmp.lt.s32.totalorder %s9, 9
    %p157 = pnand %p155, %p156
    %p158 = pneg %p157
    // Predicated region
    $region29: #{output_layer_pallas.1} parent=5 // pred_check
      _
    $region30: #{output_layer_pallas.1} parent=5 // pred_check_branch
      %160 = sbr.rel (%p157) target = $region32
    $region31: #{output_layer_pallas.1} parent=5 // pred_region
      %s161 = ssub.s32 %s9, 1
      %p162 = scmp.lt.s32.totalorder %s18, 1
      %s163 = scalar_select %p162, %s18, 1
      %p164 = scmp.lt.s32.totalorder %s19, 3
      %s165 = scalar_select %p164, %s19, 3
      %s166 = smul.addr %s163, 4
      %s167 = sadd.s32 %s165, %s166
      %s168 = smul.addr %s167, 8
      %s169 = scalar_lea.vmem %s0, %s168
      %p170 = pneg %p49
      %p171 = pneg %p46
      %p172 = pneg %p70
      %p173 = pneg %p67
      %p174 = pneg %p91
      %p175 = pneg %p88
      %p176 = pneg %p119
      %p177 = pneg %p116
      %p178 = scmp.lt.s32.totalorder %s18, 1
      %s179 = scalar_select %p178, %s18, 1
      %p180 = scmp.lt.s32.totalorder %s19, 3
      %s181 = scalar_select %p180, %s19, 3
      %s182 = smul.addr %s179, 4
      %s183 = sadd.s32 %s181, %s182
      %s184 = smul.addr %s183, 4
      %s185 = scalar_lea.vmem %s3, %s184
      %p186 = scmp.lt.s32.totalorder %s18, 1
      %s187 = scalar_select %p186, %s18, 1
      %p188 = scmp.lt.s32.totalorder %s19, 3
      %s189 = scalar_select %p188, %s19, 3
      %s190 = smul.addr %s187, 4
      %s191 = sadd.s32 %s189, %s190
      %s192 = smul.addr %s191, 8
      %s193 = scalar_lea.vmem %s0, %s192
      %p194 = scmp.lt.s32.totalorder %s18, 1
      %s195 = scalar_select %p194, %s18, 1
      %p196 = scmp.lt.s32.totalorder %s19, 3
      %s197 = scalar_select %p196, %s19, 3
      %s198 = smul.addr %s195, 4
      %s199 = sadd.s32 %s197, %s198
      %s200 = smul.addr %s199, 4
      %s201 = scalar_lea.vmem %s3, %s200
      %v202 = vld [vmem:[%s1] sm:$0xf]
      %v203 = vld [vmem:[%s193] sm:$0xff]
      %v204 = vld [vmem:[%s2] sm:$0xf]
      %206 = vset.pattern.permute.xlu0 0
      %207 = vperm.xlu0 %206, %v204
      %v208 = vpop.permute.xlu0 %207
      %vm210 = vcmask 64512
      %v212 = vsel %vm210, %v202, 0
      %214 = vmatprep.subr.mxu0 0.0
      %215 = vmatpush1.msra.mxu0 %v203
      %216 = vmatprep.subr.mxu0 0.0
      %217 = vmatpush1.msra.mxu0 0.0
      %218 = vmatprep.subr.mxu0 0.0
      %219 = vmatpush1.msra.mxu0 0.0
      %220 = vmatprep.subr.mxu0 0.0
      %221 = vmatpush1.msra.mxu0 0.0
      %222 = vmatprep.subr.mxu0 0.0
      %223 = vmatpush1.msra.mxu0 0.0
      %224 = vmatprep.subr.mxu0 0.0
      %225 = vmatpush1.msra.mxu0 0.0
      %226 = vmatprep.subr.mxu0 0.0
      %227 = vmatpush1.msra.mxu0 0.0
      %228 = vmatprep.subr.mxu0 0.0
      %229 = vmatpush1.msra.mxu0 0.0
      %230 = vmatprep.subr.mxu0 0.0
      %231 = vmatpush1.msra.mxu0 0.0
      %232 = vmatprep.subr.mxu0 0.0
      %233 = vmatpush1.msra.mxu0 0.0
      %234 = vmatprep.subr.mxu0 0.0
      %235 = vmatpush1.msra.mxu0 0.0
      %236 = vmatprep.subr.mxu0 0.0
      %237 = vmatpush1.msra.mxu0 0.0
      %238 = vmatprep.subr.mxu0 0.0
      %239 = vmatpush1.msra.mxu0 0.0
      %240 = vmatprep.subr.mxu0 0.0
      %241 = vmatpush1.msra.mxu0 0.0
      %242 = vmatprep.subr.mxu0 0.0
      %243 = vmatpush1.msra.mxu0 0.0
      %244 = vmatprep.subr.mxu0 0.0
      %245 = vmatpush1.msra.mxu0 0.0
      %246 = vmatprep.subr.mxu0 0.0
      %247 = vmatpush1.msra.mxu0 0.0
      %248 = vmatprep.subr.mxu0 0.0
      %249 = vmatpush1.msra.mxu0 0.0
      %250 = vmatprep.subr.mxu0 0.0
      %251 = vmatpush1.msra.mxu0 0.0
      %252 = vmatprep.subr.mxu0 0.0
      %253 = vmatpush1.msra.mxu0 0.0
      %254 = vmatprep.subr.mxu0 0.0
      %255 = vmatpush1.msra.mxu0 0.0
      %256 = vmatprep.subr.mxu0 0.0
      %257 = vmatpush1.msra.mxu0 0.0
      %258 = vmatprep.subr.mxu0 0.0
      %259 = vmatpush1.msra.mxu0 0.0
      %260 = vmatprep.subr.mxu0 0.0
      %261 = vmatpush1.msra.mxu0 0.0
      %262 = vmatprep.subr.mxu0 0.0
      %263 = vmatpush1.msra.mxu0 0.0
      %264 = vmatprep.subr.mxu0 0.0
      %265 = vmatpush1.msra.mxu0 0.0
      %266 = vmatprep.subr.mxu0 0.0
      %267 = vmatpush1.msra.mxu0 0.0
      %268 = vmatprep.subr.mxu0 0.0
      %269 = vmatpush1.msra.mxu0 0.0
      %270 = vmatprep.subr.mxu0 0.0
      %271 = vmatpush1.msra.mxu0 0.0
      %272 = vmatprep.subr.mxu0 0.0
      %273 = vmatpush1.msra.mxu0 0.0
      %274 = vmatprep.subr.mxu0 0.0
      %275 = vmatpush1.msra.mxu0 0.0
      %276 = vmatprep.subr.mxu0 0.0
      %277 = vmatpush1.msra.mxu0 0.0
      %278 = vmatprep.mubr.f32.mxu0 0.0
      %279 = vmatmul.mubr.f32.gmra.mrb[0].mxu0 %v212
      %v280 = vpop.f32.mrb[0].mxu0
      %v281 = vadd.f32 %v208, %v280
      %v282 = vpop.f32.mrb[0].mxu0
      %283 = vdwg.mxu0
      %284 = vst [vmem:[%s201] sm:$0xf] %v281
      %p285 = scmp.lt.s32.totalorder %s18, 1
      %s286 = scalar_select %p285, %s18, 1
      %p287 = scmp.lt.s32.totalorder %s19, 3
      %s288 = scalar_select %p287, %s19, 3
      %s289 = smul.addr %s286, 4
      %s290 = sadd.s32 %s288, %s289
      %s291 = smul.addr %s290, 4
      %s292 = scalar_lea.vmem %s3, %s291
      // Predicated region
      $region33: #{output_layer_pallas.1} parent=31 // pred_check
        %p293 = pneg %p116
      $region34: #{output_layer_pallas.1} parent=31 // pred_check_branch
        %295 = sbr.rel (%p293) target = $region36
      $region35: #{output_layer_pallas.1} parent=31 // pred_region
        _
      $region36: #{output_layer_pallas.1} parent=31 // pred_fallthru
        _
    $region32: #{output_layer_pallas.1} parent=5 // pred_fallthru
      _
    %p296 = scmp.le.s32.totalorder 2, %s9
    // Predicated region
    $region37: #{output_layer_pallas.1} parent=5 // pred_check
      %p297 = pneg %p296
    $region38: #{output_layer_pallas.1} parent=5 // pred_check_branch
      %299 = sbr.rel (%p297) target = $region40
    $region39: #{output_layer_pallas.1} parent=5 // pred_region
      %s300 = ssub.s32 %s9, 2
      // Predicated region
      $region41: #{output_layer_pallas.1} parent=39 // pred_check
        %p301 = pneg %p122
      $region42: #{output_layer_pallas.1} parent=39 // pred_check_branch
        %303 = sbr.rel (%p301) target = $region44
      $region43: #{output_layer_pallas.1} parent=39 // pred_region
        %p304 = scmp.lt.s32.totalorder %s20, 1
        %s305 = scalar_select %p304, %s20, 1
        %p306 = scmp.lt.s32.totalorder %s21, 3
        %s307 = scalar_select %p306, %s21, 3
        %s308 = smul.addr %s305, 4
        %s309 = sadd.s32 %s307, %s308
        %s310 = smul.addr %s309, 4
        %s311 = scalar_lea.vmem %s3, %s310
      $region44: #{output_layer_pallas.1} parent=39 // pred_fallthru
        _
    $region40: #{output_layer_pallas.1} parent=5 // pred_fallthru
      _
  $region6: #{output_layer_pallas.1} parent=0 // loop_footer
    %s13 = sadd.s32 1, %s9
  $region7: #{output_layer_pallas.1} parent=0 // loop_footer_branch
    %8 = sbr.rel target = $region3
  $region8: #{output_layer_pallas.1} parent=0 // loop_exit
    _

</llo_original>
